<compile_context>
chip_gen: v5e
topology: v5e:2x2
jax: 0.10.0
libtpu: 0.0.40
codegen_flags: <defaults>
</compile_context>

<pallas_src>
import jax
import jax.numpy as jnp
from jax.experimental import pallas as pl
from jax.experimental.pallas import tpu as pltpu

HIDDEN = 256          # first Linear width from the module definition
MAX_TILE_N = 4096     # upper bound on the batch tile (rows per grid step)


def _mlp_kernel(x_ref, w1_ref, b1_ref, w2_ref, b2_ref, out_ref):
    """Fused Linear(D,256) -> ReLU -> Linear(256,1) -> Sigmoid on one batch tile."""
    x = x_ref[...]                       # (tile_n, D), native dtype (f32 or bf16)
    w1 = w1_ref[...]                     # (D, HIDDEN) f32, resident across grid steps
    b1 = b1_ref[...]                     # (1, HIDDEN) f32
    w2 = w2_ref[...]                     # (HIDDEN, 1) f32

    # Layer 1 on the MXU, f32 accumulation; ReLU on the VPU.
    h = jnp.dot(x, w1, preferred_element_type=jnp.float32) + b1      # (tile_n, 256)
    h = jnp.maximum(h, 0.0)

    # Layer 2: (tile_n, 256) @ (256, 1) on the MXU.  The kernel is HBM-bound
    # on the x stream, so the single-column matmul is nowhere near the
    # bottleneck (a VPU mul + XLU lane-reduction is an alternative if it ever
    # becomes MXU-bound).
    z = jnp.dot(h, w2, preferred_element_type=jnp.float32) + b2_ref[0]  # (tile_n, 1)

    # Sigmoid: exp goes to the EUP; the divide is only (tile_n, 1) wide, so its
    # VPU cost is negligible and we keep full precision for the final output.
    out_ref[...] = (1.0 / (1.0 + jnp.exp(-z))).astype(out_ref.dtype)


def _choose_tile_n(n, d, x_itemsize):
    """Pick the largest batch tile that keeps everything comfortably under the
    default scoped VMEM on all generations.

    Accounting (per row of a tile):
      * 2 * D * x_itemsize          -- double-buffered x block
      * ~2 * HIDDEN * 4             -- (tile_n, 256) f32 hidden activation (+ a
                                       spilled copy for the ReLU/add pipeline)
      * ~2 * 128 * 4                -- lane-padded (tile_n, 1) z / out tiles
    plus the resident weights (counted twice to be conservative about the
    pipeline's buffer allocation).
    """
    vmem_budget = 12 * 1024 * 1024                              # bytes, conservative
    weight_bytes = 2 * (d * HIDDEN * 4 + HIDDEN * 4 + HIDDEN * 4)
    per_row = 2 * d * x_itemsize + 2 * HIDDEN * 4 + 2 * 128 * 4
    avail = vmem_budget - weight_bytes
    if avail <= per_row * 8:
        # Enormous input_dim: weights dominate VMEM.  Fall back to a tiny tile.
        # TODO(synk): for input_dim large enough that w1 alone blows scoped
        # VMEM, the K dimension would also need tiling (not needed here).
        return min(n, 8)
    max_tile = avail // per_row
    tile = int(min(n, MAX_TILE_N, max_tile))
    if tile >= n:
        return n                                                # single full block
    return max(8, (tile // 8) * 8)                              # sublane-aligned


def point_discriminator_forward(x, w1, b1, w2, b2, *, tile_n=None):
    """Pallas implementation of PointDiscriminator.forward.

    Returns (output, loss) with loss=None (no pretrained DeepSVDD center was
    loaded, mirroring the default PyTorch construction).
    """
    n, d = x.shape
    assert w1.shape == (d, HIDDEN)
    assert b1.shape == (1, HIDDEN)
    assert w2.shape == (HIDDEN, 1)
    assert b2.shape == (1,)

    if tile_n is None:
        tile_n = _choose_tile_n(n, d, x.dtype.itemsize)
    tile_n = max(1, min(tile_n, n))
    grid = (pl.cdiv(n, tile_n),)

    out = pl.pallas_call(
        _mlp_kernel,
        out_shape=jax.ShapeDtypeStruct((n, 1), jnp.float32),
        grid_spec=pltpu.PrefetchScalarGridSpec(
            num_scalar_prefetch=0,
            grid=grid,
            in_specs=[
                # x streamed one batch tile per grid step (double-buffered).
                pl.BlockSpec((tile_n, d), lambda i: (i, 0)),
                # Weights / b1 / w2 resident in VMEM across all steps.
                pl.BlockSpec((d, HIDDEN), lambda i: (0, 0)),
                pl.BlockSpec((1, HIDDEN), lambda i: (0, 0)),
                pl.BlockSpec((HIDDEN, 1), lambda i: (0, 0)),
                # b2 is a single scalar -> SMEM, no padded VMEM tile / DMA.
                pl.BlockSpec(memory_space=pltpu.MemorySpace.SMEM),
            ],
            out_specs=pl.BlockSpec((tile_n, 1), lambda i: (i, 0)),
        ),
        compiler_params=pltpu.CompilerParams(
            # Batch tiles are independent -> shard across v7x's 2 TensorCores.
            dimension_semantics=("parallel",)),
    )(x, w1, b1, w2, b2)

    # TODO(synk): a lane-dense (1, tile_n) output slab (transposed store, then
    # a wrapper reshape) would avoid 1-of-128-lane masked stores; output bytes
    # are <4% of the x stream here, so it is not worth the relayout risk.
    # TODO(synk): the DeepSVDDLoss path only exists after
    # load_pretrained_weights; without a checkpoint the PyTorch module returns
    # loss=None, mirrored here.
    loss = None
    return out, loss


def init_params(key, input_dim):
    """Deterministic parameter init (PyTorch nn.Linear-like uniform ranges)."""
    k1, k2, k3, k4 = jax.random.split(key, 4)
    lim1 = 1.0 / jnp.sqrt(input_dim)
    lim2 = 1.0 / jnp.sqrt(HIDDEN)
    w1 = jax.random.uniform(k1, (input_dim, HIDDEN), jnp.float32, -lim1, lim1)
    b1 = jax.random.uniform(k2, (1, HIDDEN), jnp.float32, -lim1, lim1)
    w2 = jax.random.uniform(k3, (HIDDEN, 1), jnp.float32, -lim2, lim2)
    b2 = jax.random.uniform(k4, (1,), jnp.float32, -lim2, lim2)
    return w1, b1, w2, b2


if __name__ == "__main__":
    key = jax.random.PRNGKey(0)
    kx, kp = jax.random.split(key)

    # Small shapes, but with tile_n=16 we still exercise a 3-step pipelined
    # grid (40 rows = 2 full tiles + 1 ragged tile) with resident weights.
    batch, input_dim = 40, 32
    x = jax.random.normal(kx, (batch, input_dim), jnp.float32)
    w1, b1, w2, b2 = init_params(kp, input_dim)

    out, loss = point_discriminator_forward(x, w1, b1, w2, b2, tile_n=16)
    out = jax.block_until_ready(out)

    # Reference check in plain JAX (same math as the PyTorch module).
    h_ref = jnp.maximum(x @ w1 + b1, 0.0)
    ref = 1.0 / (1.0 + jnp.exp(-(h_ref @ w2 + b2)))
    assert out.shape == (batch, 1)
    assert loss is None
    assert jnp.allclose(out, ref, atol=1e-5, rtol=1e-5)

    print("KERNEL_OK")
</pallas_src>

<mosaic_0001>
module attributes {stable_mosaic.version = 11 : i64} {
  func.func @_mlp_kernel(%arg0: i32, %arg1: memref<16x32xf32, #tpu.memory_space<vmem>>, %arg2: memref<32x256xf32, #tpu.memory_space<vmem>>, %arg3: memref<1x256xf32, #tpu.memory_space<vmem>>, %arg4: memref<256x1xf32, #tpu.memory_space<vmem>>, %arg5: memref<1xf32, #tpu.memory_space<smem>>, %arg6: memref<16x1xf32, #tpu.memory_space<vmem>>) attributes {dimension_semantics = [#tpu.dimension_semantics<parallel>], iteration_bounds = array<i64: 3>, scalar_prefetch = 0 : i64, scratch_operands = 0 : i64, tpu.core_type = #tpu.core_type<tc>, window_params = [{transform_indices = @transform_0, window_bounds = array<i64: 16, 32>}, {pipeline_mode = #tpu.pipeline_mode<synchronous>, transform_indices = @transform_1, window_bounds = array<i64: 32, 256>}, {pipeline_mode = #tpu.pipeline_mode<synchronous>, transform_indices = @transform_2, window_bounds = array<i64: 1, 256>}, {pipeline_mode = #tpu.pipeline_mode<synchronous>, transform_indices = @transform_3, window_bounds = array<i64: 256, 1>}, {transform_indices = @transform_4, window_bounds = array<i64: 1>}, {transform_indices = @transform_5, window_bounds = array<i64: 16, 1>}]} {
    %c0 = arith.constant 0 : index
    %c0_0 = arith.constant 0 : index
    %0 = vector.load %arg1[%c0, %c0_0] : memref<16x32xf32, #tpu.memory_space<vmem>>, vector<16x32xf32>
    %c0_1 = arith.constant 0 : index
    %c0_2 = arith.constant 0 : index
    %1 = vector.load %arg2[%c0_1, %c0_2] : memref<32x256xf32, #tpu.memory_space<vmem>>, vector<32x256xf32>
    %c0_3 = arith.constant 0 : index
    %c0_4 = arith.constant 0 : index
    %2 = vector.load %arg3[%c0_3, %c0_4] : memref<1x256xf32, #tpu.memory_space<vmem>>, vector<1x256xf32>
    %c0_5 = arith.constant 0 : index
    %c0_6 = arith.constant 0 : index
    %3 = vector.load %arg4[%c0_5, %c0_6] : memref<256x1xf32, #tpu.memory_space<vmem>>, vector<256x1xf32>
    %cst = arith.constant dense<0.000000e+00> : vector<16x256xf32>
    %4 = tpu.matmul %0, %1, %cst {dimension_numbers = #tpu.dot_dimension_numbers<[1], [0], [0], [1], [0, 0, 1, 1], [], []>} : vector<16x32xf32>, vector<32x256xf32>, vector<16x256xf32> -> vector<16x256xf32>
    %5 = vector.broadcast %2 : vector<1x256xf32> to vector<16x256xf32>
    %6 = arith.addf %4, %5 : vector<16x256xf32>
    %cst_7 = arith.constant 0.000000e+00 : f32
    %7 = vector.broadcast %cst_7 : f32 to vector<16x256xf32>
    %8 = arith.maximumf %6, %7 : vector<16x256xf32>
    %cst_8 = arith.constant dense<0.000000e+00> : vector<16x1xf32>
    %9 = tpu.matmul %8, %3, %cst_8 {dimension_numbers = #tpu.dot_dimension_numbers<[1], [0], [0], [1], [0, 0, 1, 1], [], []>} : vector<16x256xf32>, vector<256x1xf32>, vector<16x1xf32> -> vector<16x1xf32>
    %c0_9 = arith.constant 0 : index
    %10 = memref.load %arg5[%c0_9] : memref<1xf32, #tpu.memory_space<smem>>
    %11 = vector.broadcast %10 : f32 to vector<16x1xf32>
    %12 = arith.addf %9, %11 : vector<16x1xf32>
    %cst_10 = arith.constant 0.000000e+00 : f32
    %13 = vector.broadcast %cst_10 : f32 to vector<16x1xf32>
    %14 = arith.subf %13, %12 : vector<16x1xf32>
    %15 = math.exp %14 : vector<16x1xf32>
    %cst_11 = arith.constant 1.000000e+00 : f32
    %16 = vector.broadcast %cst_11 : f32 to vector<16x1xf32>
    %17 = arith.addf %16, %15 : vector<16x1xf32>
    %cst_12 = arith.constant 1.000000e+00 : f32
    %18 = vector.broadcast %cst_12 : f32 to vector<16x1xf32>
    %19 = arith.divf %18, %17 : vector<16x1xf32>
    %c0_13 = arith.constant 0 : index
    %c0_14 = arith.constant 0 : index
    %20 = vector.load %arg6[%c0_13, %c0_14] : memref<16x1xf32, #tpu.memory_space<vmem>>, vector<16x1xf32>
    tpu.vector_store %arg6[%c0_13, %c0_14], %19 {strides = array<i32>} : memref<16x1xf32, #tpu.memory_space<vmem>>, vector<16x1xf32>,
    return
  }
  func.func @transform_0(%arg0: i32) -> (i32, i32) {
    %c0_i32 = arith.constant 0 : i32
    %c0_i32_0 = arith.constant 0 : i32
    return %arg0, %c0_i32 : i32, i32
  }
  func.func @transform_1(%arg0: i32) -> (i32, i32) {
    %c0_i32 = arith.constant 0 : i32
    %c0_i32_0 = arith.constant 0 : i32
    %c0_i32_1 = arith.constant 0 : i32
    return %c0_i32, %c0_i32_0 : i32, i32
  }
  func.func @transform_2(%arg0: i32) -> (i32, i32) {
    %c0_i32 = arith.constant 0 : i32
    %c0_i32_0 = arith.constant 0 : i32
    %c0_i32_1 = arith.constant 0 : i32
    return %c0_i32, %c0_i32_0 : i32, i32
  }
  func.func @transform_3(%arg0: i32) -> (i32, i32) {
    %c0_i32 = arith.constant 0 : i32
    %c0_i32_0 = arith.constant 0 : i32
    %c0_i32_1 = arith.constant 0 : i32
    return %c0_i32, %c0_i32_0 : i32, i32
  }
  func.func @transform_4(%arg0: i32) -> i32 {
    %c0_i32 = arith.constant 0 : i32
    %c0_i32_0 = arith.constant 0 : i32
    return %c0_i32 : i32
  }
  func.func @transform_5(%arg0: i32) -> (i32, i32) {
    %c0_i32 = arith.constant 0 : i32
    %c0_i32_0 = arith.constant 0 : i32
    return %arg0, %c0_i32 : i32, i32
  }
}

</mosaic_0001>

<llo_original>
// kernel: tpu_custom_call.1
$region0: #{tpu_custom_call.1}
  #allocation0 [shape = 'u32[]', space=smem, size = 0x4, offset = 0x4, fixed_abs, tag = 'smem constant byte address 0x4 - core index']
  #allocation1 [shape = 'u32[72,128]{1,0:T(1,128)}', space=vmem, size = 0x9000, scoped, tag = 'internal scratch']
  #allocation2 [shape = 'f32[1]{0:T(128)S(6)}', space=smem, size = 0x200, scoped, tag = 'scoped memory for tpu_custom_call.1']
  %s0 = inlined_call_operand.vmem [shape: f32[40,32], index: 0, kind: input, shape index: {}]
  %s1 = inlined_call_operand.vmem [shape: f32[32,256], index: 1, kind: input, shape index: {}]
  %s2 = inlined_call_operand.vmem [shape: f32[1,256], index: 2, kind: input, shape index: {}]
  %s3 = inlined_call_operand.vmem [shape: f32[256,1], index: 3, kind: input, shape index: {}]
  %s4 = inlined_call_operand.<no memory space> [shape: f32[1], index: 4, kind: input, shape index: {}]
  %s5 = inlined_call_operand.vmem [shape: f32[40,1], index: 5, kind: output, shape index: {}]
  %s6 = sld [smem:[#allocation0]]
  $region101: #{tpu_custom_call.1} parent=0
    _
  %s8 = ssub.s32 1, %s6
  %s9 = scalar_select 0, %s8, %s6
  %10 = sst [smem:[#allocation2]] %s4
  $region1: #{tpu_custom_call.1} parent=0
    #allocation3 [shape = 'u8[16384]{0}', space=vmem, size = 0x4000, scoped, tag = 'output window, operand 0']
    loop: start=0, step=1, limit=5
    $region2: #{tpu_custom_call.1} parent=1 // loop_pre_header
      _
    $region3: #{tpu_custom_call.1} parent=1 // loop_header
      %s12 = sphi 0, %s16
      %p13 = scmp.ge.s32.totalorder %s12, 5
      %s22 = sphi 0, %s24
      %s25 = sphi 0, %s22
      %s26 = sphi 0, %s25
      %s42 = sphi 0, %s26
      %s46 = sphi 0, %s46
      %s48 = sphi 0, %s46
      %s49 = sphi 0, %s48
      %s63 = sphi 0, %s49
      %s67 = sphi 0, %s67
      %s69 = sphi 0, %s67
      %s70 = sphi 0, %s69
      %s84 = sphi 0, %s70
      %s88 = sphi 0, %s88
      %s90 = sphi 0, %s88
      %s91 = sphi 0, %s90
      %s105 = sphi 0, %s91
      %s109 = sphi 0, %s109
      %s111 = sphi 0, %s109
      %s112 = sphi 0, %s111
      %s126 = sphi 0, %s112
      %s132 = sphi 0, %s134
      %s135 = sphi 0, %s132
      %s136 = sphi 0, %s135
      %s152 = sphi 0, %s136
    $region4: #{tpu_custom_call.1} parent=1 // loop_header_branch
      %15 = sbr.rel (%p13) target = $region8
    $region5: #{tpu_custom_call.1} parent=1 // loop_body
      %s17 = ssub.s32 %s12, 1
      %s18 = ssub.s32 %s12, 2
      %s19 = sadd.s32 %s12, 1
      %s20 = ssub.s32 %s12, %s19
      %p21 = scmp.eq.s32.totalorder %s20, 0
      %s23 = sadd.s32 %s22, 1
      %s24 = scalar_select %p21, %s22, %s23
      %p27 = pneg %p21
      %p28 = scmp.eq.s32.totalorder %s12, 2
      %p29 = por %p27, %p28
      %p30 = scmp.ne.s32.totalorder %s22, %s25
      %p31 = scmp.eq.s32.totalorder %s12, 0
      %p32 = por %p30, %p31
      %p33 = scmp.ne.s32.totalorder %s22, %s25
      %p34 = scmp.eq.s32.totalorder %s17, 2
      %p35 = por %p33, %p34
      %p36 = scmp.ne.s32.totalorder %s25, %s26
      %p37 = scmp.eq.s32.totalorder %s17, 0
      %p38 = por %p36, %p37
      %p39 = scmp.ne.s32.totalorder %s25, %s26
      %p40 = scmp.eq.s32.totalorder %s18, 2
      %p41 = por %p39, %p40
      %p43 = scmp.ne.s32.totalorder %s26, %s42
      %p44 = scmp.eq.s32.totalorder %s18, 0
      %p45 = por %p43, %p44
      %s47 = sadd.s32 %s46, 1
      %p50 = scmp.eq.s32.totalorder %s12, 2
      %p51 = scmp.ne.s32.totalorder %s46, %s48
      %p52 = scmp.eq.s32.totalorder %s12, 0
      %p53 = por %p51, %p52
      %p54 = scmp.ne.s32.totalorder %s46, %s48
      %p55 = scmp.eq.s32.totalorder %s17, 2
      %p56 = por %p54, %p55
      %p57 = scmp.ne.s32.totalorder %s48, %s49
      %p58 = scmp.eq.s32.totalorder %s17, 0
      %p59 = por %p57, %p58
      %p60 = scmp.ne.s32.totalorder %s48, %s49
      %p61 = scmp.eq.s32.totalorder %s18, 2
      %p62 = por %p60, %p61
      %p64 = scmp.ne.s32.totalorder %s49, %s63
      %p65 = scmp.eq.s32.totalorder %s18, 0
      %p66 = por %p64, %p65
      %s68 = sadd.s32 %s67, 1
      %p71 = scmp.eq.s32.totalorder %s12, 2
      %p72 = scmp.ne.s32.totalorder %s67, %s69
      %p73 = scmp.eq.s32.totalorder %s12, 0
      %p74 = por %p72, %p73
      %p75 = scmp.ne.s32.totalorder %s67, %s69
      %p76 = scmp.eq.s32.totalorder %s17, 2
      %p77 = por %p75, %p76
      %p78 = scmp.ne.s32.totalorder %s69, %s70
      %p79 = scmp.eq.s32.totalorder %s17, 0
      %p80 = por %p78, %p79
      %p81 = scmp.ne.s32.totalorder %s69, %s70
      %p82 = scmp.eq.s32.totalorder %s18, 2
      %p83 = por %p81, %p82
      %p85 = scmp.ne.s32.totalorder %s70, %s84
      %p86 = scmp.eq.s32.totalorder %s18, 0
      %p87 = por %p85, %p86
      %s89 = sadd.s32 %s88, 1
      %p92 = scmp.eq.s32.totalorder %s12, 2
      %p93 = scmp.ne.s32.totalorder %s88, %s90
      %p94 = scmp.eq.s32.totalorder %s12, 0
      %p95 = por %p93, %p94
      %p96 = scmp.ne.s32.totalorder %s88, %s90
      %p97 = scmp.eq.s32.totalorder %s17, 2
      %p98 = por %p96, %p97
      %p99 = scmp.ne.s32.totalorder %s90, %s91
      %p100 = scmp.eq.s32.totalorder %s17, 0
      %p101 = por %p99, %p100
      %p102 = scmp.ne.s32.totalorder %s90, %s91
      %p103 = scmp.eq.s32.totalorder %s18, 2
      %p104 = por %p102, %p103
      %p106 = scmp.ne.s32.totalorder %s91, %s105
      %p107 = scmp.eq.s32.totalorder %s18, 0
      %p108 = por %p106, %p107
      %s110 = sadd.s32 %s109, 1
      %p113 = scmp.eq.s32.totalorder %s12, 2
      %p114 = scmp.ne.s32.totalorder %s109, %s111
      %p115 = scmp.eq.s32.totalorder %s12, 0
      %p116 = por %p114, %p115
      %p117 = scmp.ne.s32.totalorder %s109, %s111
      %p118 = scmp.eq.s32.totalorder %s17, 2
      %p119 = por %p117, %p118
      %p120 = scmp.ne.s32.totalorder %s111, %s112
      %p121 = scmp.eq.s32.totalorder %s17, 0
      %p122 = por %p120, %p121
      %p123 = scmp.ne.s32.totalorder %s111, %s112
      %p124 = scmp.eq.s32.totalorder %s18, 2
      %p125 = por %p123, %p124
      %p127 = scmp.ne.s32.totalorder %s112, %s126
      %p128 = scmp.eq.s32.totalorder %s18, 0
      %p129 = por %p127, %p128
      %s130 = ssub.s32 %s12, %s19
      %p131 = scmp.eq.s32.totalorder %s130, 0
      %s133 = sadd.s32 %s132, 1
      %s134 = scalar_select %p131, %s132, %s133
      %p137 = pneg %p131
      %p138 = scmp.eq.s32.totalorder %s12, 2
      %p139 = por %p137, %p138
      %p140 = scmp.ne.s32.totalorder %s132, %s135
      %p141 = scmp.eq.s32.totalorder %s12, 0
      %p142 = por %p140, %p141
      %p143 = scmp.ne.s32.totalorder %s132, %s135
      %p144 = scmp.eq.s32.totalorder %s17, 2
      %p145 = por %p143, %p144
      %p146 = scmp.ne.s32.totalorder %s135, %s136
      %p147 = scmp.eq.s32.totalorder %s17, 0
      %p148 = por %p146, %p147
      %p149 = scmp.ne.s32.totalorder %s135, %s136
      %p150 = scmp.eq.s32.totalorder %s18, 2
      %p151 = por %p149, %p150
      %p153 = scmp.ne.s32.totalorder %s136, %s152
      %p154 = scmp.eq.s32.totalorder %s18, 0
      %p155 = por %p153, %p154
      %p156 = scmp.le.s32.totalorder 1, %s12
      %p157 = scmp.lt.s32.totalorder %s12, 4
      %p158 = pnand %p156, %p157
      %p159 = pneg %p158
      // Predicated region
      $region9: #{tpu_custom_call.1} parent=5 // pred_check
        _
      $region10: #{tpu_custom_call.1} parent=5 // pred_check_branch
        %161 = sbr.rel (%p158) target = $region12
      $region11: #{tpu_custom_call.1} parent=5 // pred_region
        %s162 = ssub.s32 %s12, 1
        // Predicated region
        $region13: #{tpu_custom_call.1} parent=11 // pred_check
          %p163 = pneg %p59
        $region14: #{tpu_custom_call.1} parent=11 // pred_check_branch
          %165 = sbr.rel (%p163) target = $region16
        $region15: #{tpu_custom_call.1} parent=11 // pred_region
          _
        $region16: #{tpu_custom_call.1} parent=11 // pred_fallthru
          _
        // Predicated region
        $region17: #{tpu_custom_call.1} parent=11 // pred_check
          %p166 = pneg %p80
        $region18: #{tpu_custom_call.1} parent=11 // pred_check_branch
          %168 = sbr.rel (%p166) target = $region20
        $region19: #{tpu_custom_call.1} parent=11 // pred_region
          _
        $region20: #{tpu_custom_call.1} parent=11 // pred_fallthru
          _
        // Predicated region
        $region21: #{tpu_custom_call.1} parent=11 // pred_check
          %p169 = pneg %p101
        $region22: #{tpu_custom_call.1} parent=11 // pred_check_branch
          %171 = sbr.rel (%p169) target = $region24
        $region23: #{tpu_custom_call.1} parent=11 // pred_region
          _
        $region24: #{tpu_custom_call.1} parent=11 // pred_fallthru
          _
        // Predicated region
        $region25: #{tpu_custom_call.1} parent=11 // pred_check
          %p172 = pneg %p122
        $region26: #{tpu_custom_call.1} parent=11 // pred_check_branch
          %174 = sbr.rel (%p172) target = $region28
        $region27: #{tpu_custom_call.1} parent=11 // pred_region
          _
        $region28: #{tpu_custom_call.1} parent=11 // pred_fallthru
          _
      $region12: #{tpu_custom_call.1} parent=5 // pred_fallthru
        _
      %p175 = scmp.lt.s32.totalorder %s12, 3
      // Predicated region
      $region29: #{tpu_custom_call.1} parent=5 // pred_check
        %p176 = pneg %p175
      $region30: #{tpu_custom_call.1} parent=5 // pred_check_branch
        %178 = sbr.rel (%p176) target = $region32
      $region31: #{tpu_custom_call.1} parent=5 // pred_region
        // Predicated region
        $region33: #{tpu_custom_call.1} parent=31 // pred_check
          %p179 = pneg %p32
        $region34: #{tpu_custom_call.1} parent=31 // pred_check_branch
          %181 = sbr.rel (%p179) target = $region36
        $region35: #{tpu_custom_call.1} parent=31 // pred_region
          %s182 = smul.u32 2, %s12
          %s183 = ssub.s32 5, %s182
          %p184 = scmp.lt.s32.totalorder %s183, 2
          %s185 = scalar_select %p184, %s183, 2
          %s186 = smul.u32 8, %s185
          %p187 = scmp.lt.s32.totalorder %s182, 4
          %s188 = scalar_select %p187, %s182, 4
          %s189 = smul.addr %s188, 8
          %s190 = scalar_lea.vmem %s0, %s189
          %s191 = smul.u32 2, %s12
          %s192 = ssub.s32 5, %s191
          %p193 = scmp.lt.s32.totalorder %s192, 2
          %s194 = scalar_select %p193, %s192, 2
          %s195 = smul.u32 8, %s194
        $region36: #{tpu_custom_call.1} parent=31 // pred_fallthru
          _
      $region32: #{tpu_custom_call.1} parent=5 // pred_fallthru
        _
      %p196 = scmp.le.s32.totalorder 1, %s12
      %p197 = scmp.lt.s32.totalorder %s12, 4
      %p198 = pnand %p196, %p197
      %p199 = pneg %p198
      // Predicated region
      $region37: #{tpu_custom_call.1} parent=5 // pred_check
        _
      $region38: #{tpu_custom_call.1} parent=5 // pred_check_branch
        %201 = sbr.rel (%p198) target = $region40
      $region39: #{tpu_custom_call.1} parent=5 // pred_region
        %s202 = ssub.s32 %s12, 1
        %s203 = smul.u32 2, %s17
        %s204 = ssub.s32 5, %s203
        %p205 = scmp.lt.s32.totalorder %s204, 2
        %s206 = scalar_select %p205, %s204, 2
        %s207 = smul.u32 8, %s206
        %p208 = scmp.lt.s32.totalorder %s203, 4
        %s209 = scalar_select %p208, %s203, 4
        %s210 = smul.addr %s209, 8
        %s211 = scalar_lea.vmem %s0, %s210
        %p212 = pneg %p38
        %p213 = pneg %p35
        %p214 = pneg %p59
        %p215 = pneg %p56
        %p216 = pneg %p80
        %p217 = pneg %p77
        %p218 = pneg %p101
        %p219 = pneg %p98
        %p220 = pneg %p122
        %p221 = pneg %p119
        %p222 = pneg %p148
        %p223 = pneg %p145
        %s224 = sand.u32 %s135, 1
        %s225 = sand.u32 %s135, 1
        %s226 = smul.addr %s225, 16
        %s227 = scalar_lea.vmem [#allocation3], %s226
        %s228 = smul.u32 2, %s17
        %s229 = ssub.s32 5, %s228
        %p230 = scmp.lt.s32.totalorder %s229, 2
        %s231 = scalar_select %p230, %s229, 2
        %s232 = smul.u32 8, %s231
        %p233 = scmp.lt.s32.totalorder %s228, 4
        %s234 = scalar_select %p233, %s228, 4
        %s235 = smul.addr %s234, 8
        %s236 = scalar_lea.vmem %s0, %s235
        %s237 = smul.u32 2, %s17
        %s238 = ssub.s32 5, %s237
        %p239 = scmp.lt.s32.totalorder %s238, 2
        %s240 = scalar_select %p239, %s238, 2
        %s241 = smul.u32 8, %s240
        %s242 = smul.u32 2, %s17
        %s243 = ssub.s32 5, %s242
        %p244 = scmp.lt.s32.totalorder %s243, 2
        %s245 = scalar_select %p244, %s243, 2
        %s246 = smul.u32 8, %s245
        %v247 = vld [vmem:[%s236] sm:$0xff]
        %v248 = vld [vmem:[%s236 + $0x8] sm:$0xff]
        %v249 = vld [vmem:[%s1] sm:$0xff]
        %v250 = vld [vmem:[%s1 + $0x8] sm:$0xff]
        %v251 = vld [vmem:[%s1 + $0x10] sm:$0xff]
        %v252 = vld [vmem:[%s1 + $0x18] sm:$0xff]
        %v253 = vld [vmem:[%s1 + $0x20] sm:$0xff]
        %v254 = vld [vmem:[%s1 + $0x28] sm:$0xff]
        %v255 = vld [vmem:[%s1 + $0x30] sm:$0xff]
        %v256 = vld [vmem:[%s1 + $0x38] sm:$0xff]
        %v257 = vld [vmem:[%s2] sm:$0x3]
        %v258 = vld [vmem:[%s3] sm:$0xff]
        %v259 = vld [vmem:[%s3 + $0x8] sm:$0xff]
        %v260 = vld [vmem:[%s3 + $0x10] sm:$0xff]
        %v261 = vld [vmem:[%s3 + $0x18] sm:$0xff]
        %v262 = vld [vmem:[%s3 + $0x20] sm:$0xff]
        %v263 = vld [vmem:[%s3 + $0x28] sm:$0xff]
        %v264 = vld [vmem:[%s3 + $0x30] sm:$0xff]
        %v265 = vld [vmem:[%s3 + $0x38] sm:$0xff]
        %v266 = vld [vmem:[%s3 + $0x40] sm:$0xff]
        %v267 = vld [vmem:[%s3 + $0x48] sm:$0xff]
        %v268 = vld [vmem:[%s3 + $0x50] sm:$0xff]
        %v269 = vld [vmem:[%s3 + $0x58] sm:$0xff]
        %v270 = vld [vmem:[%s3 + $0x60] sm:$0xff]
        %v271 = vld [vmem:[%s3 + $0x68] sm:$0xff]
        %v272 = vld [vmem:[%s3 + $0x70] sm:$0xff]
        %v273 = vld [vmem:[%s3 + $0x78] sm:$0xff]
        %v274 = vld [vmem:[%s3 + $0x80] sm:$0xff]
        %v275 = vld [vmem:[%s3 + $0x88] sm:$0xff]
        %v276 = vld [vmem:[%s3 + $0x90] sm:$0xff]
        %v277 = vld [vmem:[%s3 + $0x98] sm:$0xff]
        %v278 = vld [vmem:[%s3 + $0xa0] sm:$0xff]
        %v279 = vld [vmem:[%s3 + $0xa8] sm:$0xff]
        %v280 = vld [vmem:[%s3 + $0xb0] sm:$0xff]
        %v281 = vld [vmem:[%s3 + $0xb8] sm:$0xff]
        %v282 = vld [vmem:[%s3 + $0xc0] sm:$0xff]
        %v283 = vld [vmem:[%s3 + $0xc8] sm:$0xff]
        %v284 = vld [vmem:[%s3 + $0xd0] sm:$0xff]
        %v285 = vld [vmem:[%s3 + $0xd8] sm:$0xff]
        %v286 = vld [vmem:[%s3 + $0xe0] sm:$0xff]
        %v287 = vld [vmem:[%s3 + $0xe8] sm:$0xff]
        %v288 = vld [vmem:[%s3 + $0xf0] sm:$0xff]
        %v289 = vld [vmem:[%s3 + $0xf8] sm:$0xff]
        %v291 = vperm.slane %v257, 0
        %v292 = vperm.slane %v257, 1
        %vm295 = vcmask 261120
        %v297 = vsel %vm295, %v247, 0
        %v300 = vsel %vm295, %v248, 0
        %302 = vmatpush.msra.mxu0 0.0
        %303 = vmatpush.msra.mxu0 0.0
        %304 = vmatpush.msra.mxu0 0.0
        %305 = vmatpush.msra.mxu0 0.0
        %306 = vmatpush.msra.mxu0 0.0
        %307 = vmatpush.msra.mxu0 0.0
        %308 = vmatpush.msra.mxu0 0.0
        %309 = vmatpush.msra.mxu0 0.0
        %310 = vmatpush.msra.mxu0 0.0
        %311 = vmatpush.msra.mxu0 0.0
        %312 = vmatpush.msra.mxu0 0.0
        %313 = vmatpush.msra.mxu0 0.0
        %314 = vmatpush.msra.mxu0 %v255
        %315 = vmatpush.msra.mxu0 %v253
        %316 = vmatpush.msra.mxu0 %v251
        %317 = vmatpush.msra.mxu0 %v249
        %318 = vmatmul.f32.gmra.mxu0 %v297
        %v319 = vpop.f32.mrf.mxu0
        %v320 = vadd.f32 %v291, %v319
        %321 = vmatmul.f32.gmra.mxu0 %v300
        %v322 = vpop.f32.mrf.mxu0
        %v323 = vadd.f32 %v291, %v322
        %324 = vdwg.mxu0
        %325 = vmatpush.msra.mxu0 0.0
        %326 = vmatpush.msra.mxu0 0.0
        %327 = vmatpush.msra.mxu0 0.0
        %328 = vmatpush.msra.mxu0 0.0
        %329 = vmatpush.msra.mxu0 0.0
        %330 = vmatpush.msra.mxu0 0.0
        %331 = vmatpush.msra.mxu0 0.0
        %332 = vmatpush.msra.mxu0 0.0
        %333 = vmatpush.msra.mxu0 0.0
        %334 = vmatpush.msra.mxu0 0.0
        %335 = vmatpush.msra.mxu0 0.0
        %336 = vmatpush.msra.mxu0 0.0
        %337 = vmatpush.msra.mxu0 %v256
        %338 = vmatpush.msra.mxu0 %v254
        %339 = vmatpush.msra.mxu0 %v252
        %340 = vmatpush.msra.mxu0 %v250
        %341 = vmatmul.f32.gmra.mxu0 %v297
        %v342 = vpop.f32.mrf.mxu0
        %v343 = vadd.f32 %v292, %v342
        %344 = vmatmul.f32.gmra.mxu0 %v300
        %v345 = vpop.f32.mrf.mxu0
        %v346 = vadd.f32 %v292, %v345
        %347 = vdwg.mxu0
        %v348 = vmax.f32 %v320, 0.0
        %v349 = vmax.f32 %v343, 0.0
        %v350 = vmax.f32 %v323, 0.0
        %v351 = vmax.f32 %v346, 0.0
        %s352 = sld [smem:[#allocation2]]
        %v353 = vstv %s352
        %354 = vmatpush.msra.mxu0 %v273
        %355 = vmatpush.msra.mxu0 %v272
        %356 = vmatpush.msra.mxu0 %v271
        %357 = vmatpush.msra.mxu0 %v270
        %358 = vmatpush.msra.mxu0 %v269
        %359 = vmatpush.msra.mxu0 %v268
        %360 = vmatpush.msra.mxu0 %v267
        %361 = vmatpush.msra.mxu0 %v266
        %362 = vmatpush.msra.mxu0 %v265
        %363 = vmatpush.msra.mxu0 %v264
        %364 = vmatpush.msra.mxu0 %v263
        %365 = vmatpush.msra.mxu0 %v262
        %366 = vmatpush.msra.mxu0 %v261
        %367 = vmatpush.msra.mxu0 %v260
        %368 = vmatpush.msra.mxu0 %v259
        %369 = vmatpush.msra.mxu0 %v258
        %370 = vmatmul.f32.gmra.mxu0 %v348
        %v371 = vpop.f32.mrf.mxu0
        %v372 = vadd.f32 %v353, %v371
        %373 = vmatmul.f32.gmra.mxu0 %v350
        %v374 = vpop.f32.mrf.mxu0
        %v375 = vadd.f32 %v353, %v374
        %376 = vdwg.mxu0
        %377 = vmatpush.msra.mxu0 %v289
        %378 = vmatpush.msra.mxu0 %v288
        %379 = vmatpush.msra.mxu0 %v287
        %380 = vmatpush.msra.mxu0 %v286
        %381 = vmatpush.msra.mxu0 %v285
        %382 = vmatpush.msra.mxu0 %v284
        %383 = vmatpush.msra.mxu0 %v283
        %384 = vmatpush.msra.mxu0 %v282
        %385 = vmatpush.msra.mxu0 %v281
        %386 = vmatpush.msra.mxu0 %v280
        %387 = vmatpush.msra.mxu0 %v279
        %388 = vmatpush.msra.mxu0 %v278
        %389 = vmatpush.msra.mxu0 %v277
        %390 = vmatpush.msra.mxu0 %v276
        %391 = vmatpush.msra.mxu0 %v275
        %392 = vmatpush.msra.mxu0 %v274
        %393 = vmatmul.f32.gmra.mxu0 %v349
        %v394 = vpop.f32.mrf.mxu0
        %v395 = vadd.f32 %v372, %v394
        %396 = vmatmul.f32.gmra.mxu0 %v351
        %v397 = vpop.f32.mrf.mxu0
        %v398 = vadd.f32 %v375, %v397
        %399 = vdwg.mxu0
        %v400 = vsub.f32 0.0, %v395
        %v401 = vsub.f32 0.0, %v398
        %v402 = vmul.f32 %v400, 1.442695
        %v403 = vpow.pop %v402
        %v404 = vmul.f32 %v401, 1.442695
        %v405 = vpow.pop %v404
        %v406 = vadd.f32 %v403, 1.0
        %v407 = vadd.f32 %v405, 1.0
        %v408 = vrcp.pop %v406
        %v409 = vmul.f32 %v406, %v408
        %v410 = vsub.f32 1.0, %v409
        %v411 = vmul.f32 %v408, %v410
        %v412 = vadd.f32 %v408, %v411
        %vm413 = vweird.f32 %v406
        %vm414 = vweird.f32 %v408
        %vm415 = vmor %vm413, %vm414
        %v416 = vsel %vm415, %v408, %v412
        %v417 = vand.u32 2147483647, %v406
        %vm418 = vcmp.eq.f32.partialorder %v417, 8.507059e+37
        %v419 = vand.u32 %v406, 2147483648
        %v420 = vor.u32 1.1754944e-38, %v419
        %v421 = vsel %vm418, %v420, %v416
        %v422 = vmul.f32 1.0, %v421
        %v423 = vrcp.pop %v407
        %v424 = vmul.f32 %v407, %v423
        %v425 = vsub.f32 1.0, %v424
        %v426 = vmul.f32 %v423, %v425
        %v427 = vadd.f32 %v423, %v426
        %vm428 = vweird.f32 %v407
        %vm429 = vweird.f32 %v423
        %vm430 = vmor %vm428, %vm429
        %v431 = vsel %vm430, %v423, %v427
        %v432 = vand.u32 2147483647, %v407
        %vm433 = vcmp.eq.f32.partialorder %v432, 8.507059e+37
        %v434 = vand.u32 %v407, 2147483648
        %v435 = vor.u32 1.1754944e-38, %v434
        %v436 = vsel %vm433, %v435, %v431
        %v437 = vmul.f32 1.0, %v436
        %vm438 = vcmask 7168
        %439 = vst.msk [vmem:[%s227] sm:$0xff] %vm438, %v422
        %440 = vst.msk [vmem:[%s227 + $0x8] sm:$0xff] %vm438, %v437
        %s441 = sand.u32 %s135, 1
        %s442 = sand.u32 %s135, 1
        %s443 = smul.addr %s442, 16
        %s444 = scalar_lea.vmem [#allocation3], %s443
        // Predicated region
        $region41: #{tpu_custom_call.1} parent=39 // pred_check
          %p445 = pneg %p145
        $region42: #{tpu_custom_call.1} parent=39 // pred_check_branch
          %447 = sbr.rel (%p445) target = $region44
        $region43: #{tpu_custom_call.1} parent=39 // pred_region
          %s448 = smul.u32 2, %s17
          %s449 = ssub.s32 5, %s448
          %p450 = scmp.lt.s32.totalorder %s449, 2
          %s451 = scalar_select %p450, %s449, 2
          %s452 = smul.u32 8, %s451
          %p453 = scmp.ne.s32.totalorder 0, %s452
          %s454 = smul.addr %s448, 8
          %s455 = scalar_lea.vmem %s5, %s454
          // Predicated region
          $region45: #{tpu_custom_call.1} parent=43 // pred_check
            %p456 = pneg %p453
          $region46: #{tpu_custom_call.1} parent=43 // pred_check_branch
            %458 = sbr.rel (%p456) target = $region48
          $region47: #{tpu_custom_call.1} parent=43 // pred_region
            // Predicated region
            $region49: #{tpu_custom_call.1} parent=47 // pred_check
              _
            $region50: #{tpu_custom_call.1} parent=47 // pred_check_branch
              %460 = sbr.rel (0) target = $region52
            $region51: #{tpu_custom_call.1} parent=47 // pred_region
              // Predicated region
              $region71: #{tpu_custom_call.1} parent=51 // pred_check
                _
              $region72: #{tpu_custom_call.1} parent=51 // pred_check_branch
                %512 = sbr.rel (0) target = $region74
              $region73: #{tpu_custom_call.1} parent=51 // pred_region
                %s513 = sshrl.u32 %s451, 1
                // While loop
                $region75: #{tpu_custom_call.1} parent=73 // loop_pre_header
                  _
                $region76: #{tpu_custom_call.1} parent=73 // loop_header
                  %s515 = sphi 0, %s517
                  %p516 = scmp.ge.s32.totalorder %s515, %s513
                  %s520 = sphi 0, %s529
                  %s521 = sphi %s444, %s532
                  %s522 = sphi %s455, %s533
                $region77: #{tpu_custom_call.1} parent=73 // loop_header_branch
                  %519 = sbr.rel (%p516) target = $region81
                $region78: #{tpu_custom_call.1} parent=73 // loop_body
                  %v523 = vld [vmem:[%s521] sm:$0xff]
                  %524 = vst [vmem:[%s522] sm:$0xff] %v523
                  %v525 = vld [vmem:[%s521 + $0x8] sm:$0xff]
                  %526 = vst [vmem:[%s522 + $0x8] sm:$0xff] %v525
                  %s527 = sadd.s32 1, %s520
                  %p528 = scmp.ge.s32.totalorder %s527, %s513
                  %s529 = scalar_select %p528, 0, %s527
                  %s530 = smul.u32 %s529, 16
                  %s531 = smul.u32 %s529, 16
                  %s532 = scalar_lea.vmem %s444, %s530 [#allocation3]
                  %s533 = scalar_lea.vmem %s455, %s531
                $region79: #{tpu_custom_call.1} parent=73 // loop_footer
                  %s517 = sadd.s32 %s515, 1
                $region80: #{tpu_custom_call.1} parent=73 // loop_footer_branch
                  %514 = sbr.rel target = $region76
                $region81: #{tpu_custom_call.1} parent=73 // loop_exit
                  _
                %s534 = sshrl.u32 %s451, 1
                %s535 = sand.u32 %s451, 1
                %s536 = smul.u32 %s534, 2
                %s537 = smul.u32 8, %s536
                %s538 = scalar_lea.vmem %s444, %s537 [#allocation3]
                %s539 = smul.u32 8, %s536
                %s540 = scalar_lea.vmem %s455, %s539
                // While loop
                $region82: #{tpu_custom_call.1} parent=73 // loop_pre_header
                  _
                $region83: #{tpu_custom_call.1} parent=73 // loop_header
                  %s542 = sphi 0, %s544
                  %p543 = scmp.ge.s32.totalorder %s542, %s535
                  %s547 = sphi 0, %s554
                  %s548 = sphi %s538, %s557
                  %s549 = sphi %s540, %s558
                $region84: #{tpu_custom_call.1} parent=73 // loop_header_branch
                  %546 = sbr.rel (%p543) target = $region88
                $region85: #{tpu_custom_call.1} parent=73 // loop_body
                  %v550 = vld [vmem:[%s548] sm:$0xff]
                  %551 = vst [vmem:[%s549] sm:$0xff] %v550
                  %s552 = sadd.s32 1, %s547
                  %p553 = scmp.ge.s32.totalorder %s552, %s535
                  %s554 = scalar_select %p553, 0, %s552
                  %s555 = smul.u32 %s554, 8
                  %s556 = smul.u32 %s554, 8
                  %s557 = scalar_lea.vmem %s538, %s555 [#allocation3]
                  %s558 = scalar_lea.vmem %s540, %s556
                $region86: #{tpu_custom_call.1} parent=73 // loop_footer
                  %s544 = sadd.s32 %s542, 1
                $region87: #{tpu_custom_call.1} parent=73 // loop_footer_branch
                  %541 = sbr.rel target = $region83
                $region88: #{tpu_custom_call.1} parent=73 // loop_exit
                  _
              $region74: #{tpu_custom_call.1} parent=51 // pred_fallthru
                _
              // Predicated region
              $region89: #{tpu_custom_call.1} parent=51 // pred_check
                _
              $region90: #{tpu_custom_call.1} parent=51 // pred_check_branch
                %560 = sbr.rel target = $region92
              $region91: #{tpu_custom_call.1} parent=51 // pred_region
                _
              $region92: #{tpu_custom_call.1} parent=51 // pred_fallthru
                _
            $region52: #{tpu_custom_call.1} parent=47 // pred_fallthru
              _
            // Predicated region
            $region53: #{tpu_custom_call.1} parent=47 // pred_check
              _
            $region54: #{tpu_custom_call.1} parent=47 // pred_check_branch
              %462 = sbr.rel target = $region56
            $region55: #{tpu_custom_call.1} parent=47 // pred_region
              %s464 = ssub.s32 256, 1
              %s465 = sshrl.u32 %s451, 1
              // While loop
              $region57: #{tpu_custom_call.1} parent=55 // loop_pre_header
                _
              $region58: #{tpu_custom_call.1} parent=55 // loop_header
                %s467 = sphi 0, %s469
                %p468 = scmp.ge.s32.totalorder %s467, %s465
                %s472 = sphi 0, %s481
                %s473 = sphi %s444, %s484
                %s474 = sphi %s455, %s485
              $region59: #{tpu_custom_call.1} parent=55 // loop_header_branch
                %471 = sbr.rel (%p468) target = $region63
              $region60: #{tpu_custom_call.1} parent=55 // loop_body
                %v475 = vld [vmem:[%s473] sm:%s464]
                %476 = vst [vmem:[%s474] sm:%s464] %v475
                %v477 = vld [vmem:[%s473 + $0x8] sm:%s464]
                %478 = vst [vmem:[%s474 + $0x8] sm:%s464] %v477
                %s479 = sadd.s32 1, %s472
                %p480 = scmp.ge.s32.totalorder %s479, %s465
                %s481 = scalar_select %p480, 0, %s479
                %s482 = smul.u32 %s481, 16
                %s483 = smul.u32 %s481, 16
                %s484 = scalar_lea.vmem %s444, %s482 [#allocation3]
                %s485 = scalar_lea.vmem %s455, %s483
              $region61: #{tpu_custom_call.1} parent=55 // loop_footer
                %s469 = sadd.s32 %s467, 1
              $region62: #{tpu_custom_call.1} parent=55 // loop_footer_branch
                %466 = sbr.rel target = $region58
              $region63: #{tpu_custom_call.1} parent=55 // loop_exit
                _
              %s486 = sshrl.u32 %s451, 1
              %s487 = sand.u32 %s451, 1
              %s488 = smul.u32 %s486, 2
              %s489 = smul.u32 8, %s488
              %s490 = scalar_lea.vmem %s444, %s489 [#allocation3]
              %s491 = smul.u32 8, %s488
              %s492 = scalar_lea.vmem %s455, %s491
              // While loop
              $region64: #{tpu_custom_call.1} parent=55 // loop_pre_header
                _
              $region65: #{tpu_custom_call.1} parent=55 // loop_header
                %s494 = sphi 0, %s496
                %p495 = scmp.ge.s32.totalorder %s494, %s487
                %s499 = sphi 0, %s506
                %s500 = sphi %s490, %s509
                %s501 = sphi %s492, %s510
              $region66: #{tpu_custom_call.1} parent=55 // loop_header_branch
                %498 = sbr.rel (%p495) target = $region70
              $region67: #{tpu_custom_call.1} parent=55 // loop_body
                %v502 = vld [vmem:[%s500] sm:%s464]
                %503 = vst [vmem:[%s501] sm:%s464] %v502
                %s504 = sadd.s32 1, %s499
                %p505 = scmp.ge.s32.totalorder %s504, %s487
                %s506 = scalar_select %p505, 0, %s504
                %s507 = smul.u32 %s506, 8
                %s508 = smul.u32 %s506, 8
                %s509 = scalar_lea.vmem %s490, %s507 [#allocation3]
                %s510 = scalar_lea.vmem %s492, %s508
              $region68: #{tpu_custom_call.1} parent=55 // loop_footer
                %s496 = sadd.s32 %s494, 1
              $region69: #{tpu_custom_call.1} parent=55 // loop_footer_branch
                %493 = sbr.rel target = $region65
              $region70: #{tpu_custom_call.1} parent=55 // loop_exit
                _
            $region56: #{tpu_custom_call.1} parent=47 // pred_fallthru
              _
          $region48: #{tpu_custom_call.1} parent=43 // pred_fallthru
            _
          %561 = vnop
        $region44: #{tpu_custom_call.1} parent=39 // pred_fallthru
          _
      $region40: #{tpu_custom_call.1} parent=5 // pred_fallthru
        _
      %p562 = scmp.le.s32.totalorder 2, %s12
      // Predicated region
      $region93: #{tpu_custom_call.1} parent=5 // pred_check
        %p563 = pneg %p562
      $region94: #{tpu_custom_call.1} parent=5 // pred_check_branch
        %565 = sbr.rel (%p563) target = $region96
      $region95: #{tpu_custom_call.1} parent=5 // pred_region
        %s566 = ssub.s32 %s12, 2
        // Predicated region
        $region97: #{tpu_custom_call.1} parent=95 // pred_check
          %p567 = pneg %p151
        $region98: #{tpu_custom_call.1} parent=95 // pred_check_branch
          %569 = sbr.rel (%p567) target = $region100
        $region99: #{tpu_custom_call.1} parent=95 // pred_region
          %s570 = sand.u32 %s136, 1
          %s571 = sand.u32 %s136, 1
          %s572 = smul.addr %s571, 16
          %s573 = scalar_lea.vmem [#allocation3], %s572
        $region100: #{tpu_custom_call.1} parent=95 // pred_fallthru
          _
      $region96: #{tpu_custom_call.1} parent=5 // pred_fallthru
        _
    $region6: #{tpu_custom_call.1} parent=1 // loop_footer
      %s16 = sadd.s32 1, %s12
    $region7: #{tpu_custom_call.1} parent=1 // loop_footer_branch
      %11 = sbr.rel target = $region3
    $region8: #{tpu_custom_call.1} parent=1 // loop_exit
      _

</llo_original>
